<compile_context>
chip_gen: v7x
topology: tpu7x:2x2x1
jax: 0.10.0
libtpu: 0.0.40
codegen_flags: <defaults>
</compile_context>

<pallas_src>
import functools

import jax
import jax.numpy as jnp
from jax import lax
from jax.experimental import pallas as pl
from jax.experimental.pallas import tpu as pltpu


def _decoder_deep_kernel(x_ref, w1_ref, w2_ref, o_ref):
    # x_ref:  (tm, K) bf16
    # w1_ref: (H, K)  bf16   (nn.Linear layout: (out_features, in_features))
    # w2_ref: (N, H)  bf16
    # o_ref:  (tm, N) bf16
    # Layer 1: contract on K  (x @ W1.T), f32 MXU accumulation, bf16 intermediate
    # to match the PyTorch bf16 Linear output dtype.
    h = lax.dot_general(
        x_ref[...],
        w1_ref[...],
        dimension_numbers=(((1,), (1,)), ((), ())),
        preferred_element_type=jnp.float32,
    ).astype(jnp.bfloat16)
    # Layer 2: contract on H  (h @ W2.T).
    out = lax.dot_general(
        h,
        w2_ref[...],
        dimension_numbers=(((1,), (1,)), ((), ())),
        preferred_element_type=jnp.float32,
    )
    o_ref[...] = out.astype(o_ref.dtype)


@functools.partial(jax.jit, static_argnames=("tm",))
def decoder_deep_forward(x, w1, w2, *, tm=128):
    """x: (B, S, input_dim) bf16; w1: (hidden, input) bf16; w2: (output, hidden) bf16."""
    B, S, K = x.shape
    H, K1 = w1.shape
    N, H1 = w2.shape
    assert K == K1 and H == H1, "weight shapes must match nn.Linear layout"
    # Lane-dense / MXU-aligned feature dims (example shapes below satisfy this).
    assert K % 128 == 0 and H % 128 == 0 and N % 128 == 0, (
        "feature dims must be multiples of 128 for lane-dense tiles"
    )

    M = B * S
    x2d = x.reshape(M, K)

    # Pad M up to a multiple of tm (zero rows contribute nothing; sliced off below).
    Mp = ((M + tm - 1) // tm) * tm
    if Mp != M:
        x2d = jnp.pad(x2d, ((0, Mp - M), (0, 0)))

    n_tiles = Mp // tm
    # Advisory cost hint for XLA's scheduler (two bf16 matmuls, no transcendentals).
    cost = pl.CostEstimate(
        flops=2 * Mp * K * H + 2 * Mp * H * N,
        transcendentals=0,
        bytes_accessed=2 * (Mp * K + H * K + N * H + Mp * N),
    )

    out2d = pl.pallas_call(
        _decoder_deep_kernel,
        out_shape=jax.ShapeDtypeStruct((Mp, N), x.dtype),
        grid_spec=pltpu.PrefetchScalarGridSpec(
            num_scalar_prefetch=0,
            grid=(n_tiles,),
            in_specs=[
                pl.BlockSpec((tm, K), lambda i: (i, 0)),  # row tile of activations
                pl.BlockSpec((H, K), lambda i: (0, 0)),   # W1 resident in VMEM
                pl.BlockSpec((N, H), lambda i: (0, 0)),   # W2 resident in VMEM
            ],
            out_specs=pl.BlockSpec((tm, N), lambda i: (i, 0)),
        ),
        compiler_params=pltpu.CompilerParams(
            dimension_semantics=("parallel",),
        ),
        cost_estimate=cost,
    )(x2d, w1, w2)

    if Mp != M:
        out2d = out2d[:M]
    return out2d.reshape(B, S, N)


def decoder_deep_forward_ref(x, w1, w2):
    # Pure-JAX reference of the PyTorch forward (bf16 linears, no bias,
    # f32 accumulation, bf16 intermediate).
    h = jnp.dot(x.astype(jnp.float32), w1.T.astype(jnp.float32)).astype(jnp.bfloat16)
    out = jnp.dot(h.astype(jnp.float32), w2.T.astype(jnp.float32)).astype(jnp.bfloat16)
    return out


if __name__ == "__main__":
    # Deterministic parameter / input setup (synthetic; no checkpoint load).
    layer_id = 0
    input_dim = 128
    hidden_dim = 256
    output_dim = 128
    batch, seq = 2, 128  # M = 256 -> grid of 2 parallel row tiles (tm = 128)

    key = jax.random.PRNGKey(0)
    kx, kw1, kw2 = jax.random.split(key, 3)

    x = jax.random.normal(kx, (batch, seq, input_dim), dtype=jnp.float32).astype(
        jnp.bfloat16
    )
    # nn.Linear default init ~ U(-1/sqrt(fan_in), 1/sqrt(fan_in)); deterministic here.
    b1 = 1.0 / (input_dim ** 0.5)
    w1 = jax.random.uniform(
        kw1, (hidden_dim, input_dim), minval=-b1, maxval=b1, dtype=jnp.float32
    ).astype(jnp.bfloat16)
    b2 = 1.0 / (hidden_dim ** 0.5)
    w2 = jax.random.uniform(
        kw2, (output_dim, hidden_dim), minval=-b2, maxval=b2, dtype=jnp.float32
    ).astype(jnp.bfloat16)

    out = decoder_deep_forward(x, w1, w2)
    out = jax.block_until_ready(out)

    ref = decoder_deep_forward_ref(x, w1, w2)
    assert out.shape == (batch, seq, output_dim)
    assert out.dtype == jnp.bfloat16
    err = jnp.max(jnp.abs(out.astype(jnp.float32) - ref.astype(jnp.float32)))
    assert float(err) < 5e-2, f"max abs err {err}"

    print("KERNEL_OK")
</pallas_src>

<mosaic_0001>
module attributes {stable_mosaic.version = 11 : i64} {
  func.func @_decoder_deep_kernel(%arg0: i32, %arg1: memref<128x128xbf16, #tpu.memory_space<vmem>>, %arg2: memref<256x128xbf16, #tpu.memory_space<vmem>>, %arg3: memref<128x256xbf16, #tpu.memory_space<vmem>>, %arg4: memref<128x128xbf16, #tpu.memory_space<vmem>>) attributes {dimension_semantics = [#tpu.dimension_semantics<parallel>], iteration_bounds = array<i64: 2>, scalar_prefetch = 0 : i64, scratch_operands = 0 : i64, tpu.core_type = #tpu.core_type<tc>, window_params = [{transform_indices = @transform_0, window_bounds = array<i64: 128, 128>}, {pipeline_mode = #tpu.pipeline_mode<synchronous>, transform_indices = @transform_1, window_bounds = array<i64: 256, 128>}, {pipeline_mode = #tpu.pipeline_mode<synchronous>, transform_indices = @transform_2, window_bounds = array<i64: 128, 256>}, {transform_indices = @transform_3, window_bounds = array<i64: 128, 128>}]} {
    %c0 = arith.constant 0 : index
    %c0_0 = arith.constant 0 : index
    %0 = vector.load %arg1[%c0, %c0_0] : memref<128x128xbf16, #tpu.memory_space<vmem>>, vector<128x128xbf16>
    %c0_1 = arith.constant 0 : index
    %c0_2 = arith.constant 0 : index
    %1 = vector.load %arg2[%c0_1, %c0_2] : memref<256x128xbf16, #tpu.memory_space<vmem>>, vector<256x128xbf16>
    %cst = arith.constant dense<0.000000e+00> : vector<128x256xf32>
    %2 = tpu.matmul %0, %1, %cst {dimension_numbers = #tpu.dot_dimension_numbers<[1], [1], [0], [0], [0, 0, 1, 0], [], []>} : vector<128x128xbf16>, vector<256x128xbf16>, vector<128x256xf32> -> vector<128x256xf32>
    %3 = arith.truncf %2 : vector<128x256xf32> to vector<128x256xbf16>
    %c0_3 = arith.constant 0 : index
    %c0_4 = arith.constant 0 : index
    %4 = vector.load %arg3[%c0_3, %c0_4] : memref<128x256xbf16, #tpu.memory_space<vmem>>, vector<128x256xbf16>
    %cst_5 = arith.constant dense<0.000000e+00> : vector<128x128xf32>
    %5 = tpu.matmul %3, %4, %cst_5 {dimension_numbers = #tpu.dot_dimension_numbers<[1], [1], [0], [0], [0, 0, 1, 0], [], []>} : vector<128x256xbf16>, vector<128x256xbf16>, vector<128x128xf32> -> vector<128x128xf32>
    %6 = arith.truncf %5 : vector<128x128xf32> to vector<128x128xbf16>
    %c0_6 = arith.constant 0 : index
    %c0_7 = arith.constant 0 : index
    %7 = vector.load %arg4[%c0_6, %c0_7] : memref<128x128xbf16, #tpu.memory_space<vmem>>, vector<128x128xbf16>
    tpu.vector_store %arg4[%c0_6, %c0_7], %6 {strides = array<i32>} : memref<128x128xbf16, #tpu.memory_space<vmem>>, vector<128x128xbf16>,
    return
  }
  func.func @transform_0(%arg0: i32) -> (i32, i32) {
    %c0_i32 = arith.constant 0 : i32
    %c0_i32_0 = arith.constant 0 : i32
    return %arg0, %c0_i32 : i32, i32
  }
  func.func @transform_1(%arg0: i32) -> (i32, i32) {
    %c0_i32 = arith.constant 0 : i32
    %c0_i32_0 = arith.constant 0 : i32
    %c0_i32_1 = arith.constant 0 : i32
    return %c0_i32, %c0_i32_0 : i32, i32
  }
  func.func @transform_2(%arg0: i32) -> (i32, i32) {
    %c0_i32 = arith.constant 0 : i32
    %c0_i32_0 = arith.constant 0 : i32
    %c0_i32_1 = arith.constant 0 : i32
    return %c0_i32, %c0_i32_0 : i32, i32
  }
  func.func @transform_3(%arg0: i32) -> (i32, i32) {
    %c0_i32 = arith.constant 0 : i32
    %c0_i32_0 = arith.constant 0 : i32
    return %arg0, %c0_i32 : i32, i32
  }
}

</mosaic_0001>

<llo_original>
// kernel: decoder_deep_forward.1
$region0: #{decoder_deep_forward.1}
  #allocation0 [shape = 'u32[]', space=smem, size = 0x4, offset = 0x4, fixed_abs, tag = 'smem constant byte address 0x4 - core index']
  #allocation1 [shape = 'u32[144,128]{1,0:T(1,128)}', space=vmem, size = 0x12000, scoped, tag = 'internal scratch']
  %s0 = inlined_call_operand.hbm [shape: bf16[256,128], index: 0, kind: input, shape index: {}]
  %s1 = inlined_call_operand.hbm [shape: bf16[256,128], index: 1, kind: input, shape index: {}]
  %s2 = inlined_call_operand.hbm [shape: bf16[128,256], index: 2, kind: input, shape index: {}]
  %s3 = inlined_call_operand.hbm [shape: bf16[256,128], index: 3, kind: output, shape index: {}]
  %s4 = sld [smem:[#allocation0]]
  $region57: #{decoder_deep_forward.1} parent=0
    _
  %s6 = ssub.s32 1, %s4
  %s7 = scalar_select 0, %s6, %s4
  $region1: #{decoder_deep_forward.1} parent=0
    #allocation2 [shape = 'u8[65536]{0}', space=vmem, size = 0x10000, scoped, tag = 'input window, operand 0']
    #allocation3 [shape = 's32[2]{0}', space=sflag, size = 0x8, scoped, tag = 'scoped memory for decoder_deep_forward.1']
    #allocation4 [shape = 's32[2]{0}', space=sflag, size = 0x8, scoped, tag = 'scoped memory for decoder_deep_forward.1']
    #allocation5 [shape = 'u8[65536]{0}', space=vmem, size = 0x10000, scoped, tag = 'input window, operand 1, single buffered']
    #allocation6 [shape = 's32[1]{0}', space=sflag, size = 0x4, scoped, tag = 'scoped memory for decoder_deep_forward.1']
    #allocation7 [shape = 'u8[65536]{0}', space=vmem, size = 0x10000, scoped, tag = 'input window, operand 2, single buffered']
    #allocation8 [shape = 'u8[65536]{0}', space=vmem, size = 0x10000, scoped, tag = 'output window, operand 0']
    %8 = vsyncpa [#allocation3], 0
    %s9 = scalar_lea.sflag [#allocation3], 1
    %10 = vsyncpa %s9, 0
    %11 = vsyncpa [#allocation6], 0
    %12 = vsyncpa [#allocation4], 0
    %s13 = scalar_lea.sflag [#allocation4], 1
    %14 = vsyncpa %s13, 0
    loop: start=0, step=1, limit=4
    $region2: #{decoder_deep_forward.1} parent=1 // loop_pre_header
      _
    $region3: #{decoder_deep_forward.1} parent=1 // loop_header
      %s16 = sphi 0, %s20
      %p17 = scmp.ge.s32.totalorder %s16, 4
      %s26 = sphi 0, %s28
      %s29 = sphi 0, %s26
      %s30 = sphi 0, %s29
      %s46 = sphi 0, %s30
      %s50 = sphi 0, %s50
      %s52 = sphi 0, %s50
      %s53 = sphi 0, %s52
      %s67 = sphi 0, %s53
      %s71 = sphi 0, %s71
      %s73 = sphi 0, %s71
      %s74 = sphi 0, %s73
      %s88 = sphi 0, %s74
      %s94 = sphi 0, %s96
      %s97 = sphi 0, %s94
      %s98 = sphi 0, %s97
      %s114 = sphi 0, %s98
    $region4: #{decoder_deep_forward.1} parent=1 // loop_header_branch
      %19 = sbr.rel (%p17) target = $region8
    $region5: #{decoder_deep_forward.1} parent=1 // loop_body
      %s21 = ssub.s32 %s16, 1
      %s22 = ssub.s32 %s16, 2
      %s23 = sadd.s32 %s16, 1
      %s24 = ssub.s32 %s16, %s23
      %p25 = scmp.eq.s32.totalorder %s24, 0
      %s27 = sadd.s32 %s26, 1
      %s28 = scalar_select %p25, %s26, %s27
      %p31 = pneg %p25
      %p32 = scmp.eq.s32.totalorder %s16, 1
      %p33 = por %p31, %p32
      %p34 = scmp.ne.s32.totalorder %s26, %s29
      %p35 = scmp.eq.s32.totalorder %s16, 0
      %p36 = por %p34, %p35
      %p37 = scmp.ne.s32.totalorder %s26, %s29
      %p38 = scmp.eq.s32.totalorder %s21, 1
      %p39 = por %p37, %p38
      %p40 = scmp.ne.s32.totalorder %s29, %s30
      %p41 = scmp.eq.s32.totalorder %s21, 0
      %p42 = por %p40, %p41
      %p43 = scmp.ne.s32.totalorder %s29, %s30
      %p44 = scmp.eq.s32.totalorder %s22, 1
      %p45 = por %p43, %p44
      %p47 = scmp.ne.s32.totalorder %s30, %s46
      %p48 = scmp.eq.s32.totalorder %s22, 0
      %p49 = por %p47, %p48
      %s51 = sadd.s32 %s50, 1
      %p54 = scmp.eq.s32.totalorder %s16, 1
      %p55 = scmp.ne.s32.totalorder %s50, %s52
      %p56 = scmp.eq.s32.totalorder %s16, 0
      %p57 = por %p55, %p56
      %p58 = scmp.ne.s32.totalorder %s50, %s52
      %p59 = scmp.eq.s32.totalorder %s21, 1
      %p60 = por %p58, %p59
      %p61 = scmp.ne.s32.totalorder %s52, %s53
      %p62 = scmp.eq.s32.totalorder %s21, 0
      %p63 = por %p61, %p62
      %p64 = scmp.ne.s32.totalorder %s52, %s53
      %p65 = scmp.eq.s32.totalorder %s22, 1
      %p66 = por %p64, %p65
      %p68 = scmp.ne.s32.totalorder %s53, %s67
      %p69 = scmp.eq.s32.totalorder %s22, 0
      %p70 = por %p68, %p69
      %s72 = sadd.s32 %s71, 1
      %p75 = scmp.eq.s32.totalorder %s16, 1
      %p76 = scmp.ne.s32.totalorder %s71, %s73
      %p77 = scmp.eq.s32.totalorder %s16, 0
      %p78 = por %p76, %p77
      %p79 = scmp.ne.s32.totalorder %s71, %s73
      %p80 = scmp.eq.s32.totalorder %s21, 1
      %p81 = por %p79, %p80
      %p82 = scmp.ne.s32.totalorder %s73, %s74
      %p83 = scmp.eq.s32.totalorder %s21, 0
      %p84 = por %p82, %p83
      %p85 = scmp.ne.s32.totalorder %s73, %s74
      %p86 = scmp.eq.s32.totalorder %s22, 1
      %p87 = por %p85, %p86
      %p89 = scmp.ne.s32.totalorder %s74, %s88
      %p90 = scmp.eq.s32.totalorder %s22, 0
      %p91 = por %p89, %p90
      %s92 = ssub.s32 %s16, %s23
      %p93 = scmp.eq.s32.totalorder %s92, 0
      %s95 = sadd.s32 %s94, 1
      %s96 = scalar_select %p93, %s94, %s95
      %p99 = pneg %p93
      %p100 = scmp.eq.s32.totalorder %s16, 1
      %p101 = por %p99, %p100
      %p102 = scmp.ne.s32.totalorder %s94, %s97
      %p103 = scmp.eq.s32.totalorder %s16, 0
      %p104 = por %p102, %p103
      %p105 = scmp.ne.s32.totalorder %s94, %s97
      %p106 = scmp.eq.s32.totalorder %s21, 1
      %p107 = por %p105, %p106
      %p108 = scmp.ne.s32.totalorder %s97, %s98
      %p109 = scmp.eq.s32.totalorder %s21, 0
      %p110 = por %p108, %p109
      %p111 = scmp.ne.s32.totalorder %s97, %s98
      %p112 = scmp.eq.s32.totalorder %s22, 1
      %p113 = por %p111, %p112
      %p115 = scmp.ne.s32.totalorder %s98, %s114
      %p116 = scmp.eq.s32.totalorder %s22, 0
      %p117 = por %p115, %p116
      %p118 = scmp.le.s32.totalorder 1, %s16
      %p119 = scmp.lt.s32.totalorder %s16, 3
      %p120 = pnand %p118, %p119
      %p121 = pneg %p120
      // Predicated region
      $region9: #{decoder_deep_forward.1} parent=5 // pred_check
        _
      $region10: #{decoder_deep_forward.1} parent=5 // pred_check_branch
        %123 = sbr.rel (%p120) target = $region12
      $region11: #{decoder_deep_forward.1} parent=5 // pred_region
        %s124 = ssub.s32 %s16, 1
        // Predicated region
        $region13: #{decoder_deep_forward.1} parent=11 // pred_check
          %p125 = pneg %p63
        $region14: #{decoder_deep_forward.1} parent=11 // pred_check_branch
          %127 = sbr.rel (%p125) target = $region16
        $region15: #{decoder_deep_forward.1} parent=11 // pred_region
          %s129 = ssub.s32 2048, 2048
          %130 = vsyncadd [#allocation6], %s129
          %s131 = sshll.u32 [#allocation5], 4
          %s132 = int_to_ptr.vmem [resolvable:$true] %s131
          %137 = dma.hbm_to_vmem [thread:$0]  %s1, 2048, %s132, [#allocation6], 64, 64, 4
        $region16: #{decoder_deep_forward.1} parent=11 // pred_fallthru
          _
        // Predicated region
        $region17: #{decoder_deep_forward.1} parent=11 // pred_check
          %p138 = pneg %p84
        $region18: #{decoder_deep_forward.1} parent=11 // pred_check_branch
          %140 = sbr.rel (%p138) target = $region20
        $region19: #{decoder_deep_forward.1} parent=11 // pred_region
          %s142 = ssub.s32 2048, 2048
          %143 = vsyncadd [#allocation6], %s142
          %s144 = sshll.u32 [#allocation7], 4
          %s145 = int_to_ptr.vmem [resolvable:$true] %s144
          %150 = dma.hbm_to_vmem [thread:$0]  %s2, 2048, %s145, [#allocation6], 128, 128, 8
        $region20: #{decoder_deep_forward.1} parent=11 // pred_fallthru
          _
      $region12: #{decoder_deep_forward.1} parent=5 // pred_fallthru
        _
      %p151 = scmp.lt.s32.totalorder %s16, 2
      // Predicated region
      $region21: #{decoder_deep_forward.1} parent=5 // pred_check
        %p152 = pneg %p151
      $region22: #{decoder_deep_forward.1} parent=5 // pred_check_branch
        %154 = sbr.rel (%p152) target = $region24
      $region23: #{decoder_deep_forward.1} parent=5 // pred_region
        // Predicated region
        $region25: #{decoder_deep_forward.1} parent=23 // pred_check
          %p155 = pneg %p36
        $region26: #{decoder_deep_forward.1} parent=23 // pred_check_branch
          %157 = sbr.rel (%p155) target = $region28
        $region27: #{decoder_deep_forward.1} parent=23 // pred_region
          %s158 = sand.u32 %s26, 1
          %s159 = scalar_lea.sflag [#allocation3], %s158
          %s160 = sand.u32 %s26, 1
          %s161 = smul.addr %s160, 64
          %s162 = scalar_lea.vmem [#allocation2], %s161
          %s163 = smul.u32 16, %s16
          %s165 = ssub.s32 1024, 1024
          %166 = vsyncadd %s159, %s165
          %s167 = smul.addr %s163, 64
          %s168 = scalar_lea.hbm %s0, %s167
          %s169 = sshll.u32 %s162, 4
          %s170 = int_to_ptr.vmem [resolvable:$true] %s169
          %175 = dma.hbm_to_vmem [thread:$0]  %s168, 1024, %s170, %s159, 64, 64, 4
        $region28: #{decoder_deep_forward.1} parent=23 // pred_fallthru
          _
      $region24: #{decoder_deep_forward.1} parent=5 // pred_fallthru
        _
      %p176 = scmp.le.s32.totalorder 1, %s16
      %p177 = scmp.lt.s32.totalorder %s16, 3
      %p178 = pnand %p176, %p177
      %p179 = pneg %p178
      // Predicated region
      $region29: #{decoder_deep_forward.1} parent=5 // pred_check
        _
      $region30: #{decoder_deep_forward.1} parent=5 // pred_check_branch
        %181 = sbr.rel (%p178) target = $region32
      $region31: #{decoder_deep_forward.1} parent=5 // pred_region
        %s182 = ssub.s32 %s16, 1
        %s183 = sand.u32 %s29, 1
        %s184 = scalar_lea.sflag [#allocation3], %s183
        %s185 = sand.u32 %s29, 1
        %s186 = smul.addr %s185, 64
        %s187 = scalar_lea.vmem [#allocation2], %s186
        // Predicated region
        $region33: #{decoder_deep_forward.1} parent=31 // pred_check
          %p188 = pneg %p42
        $region34: #{decoder_deep_forward.1} parent=31 // pred_check_branch
          %190 = sbr.rel (%p188) target = $region36
        $region35: #{decoder_deep_forward.1} parent=31 // pred_region
          %191 = dma.done %s184, 1024
        $region36: #{decoder_deep_forward.1} parent=31 // pred_fallthru
          _
        // Predicated region
        $region37: #{decoder_deep_forward.1} parent=31 // pred_check
          %p192 = pneg %p63
        $region38: #{decoder_deep_forward.1} parent=31 // pred_check_branch
          %194 = sbr.rel (%p192) target = $region40
        $region39: #{decoder_deep_forward.1} parent=31 // pred_region
          %195 = dma.done [#allocation6], 2048
        $region40: #{decoder_deep_forward.1} parent=31 // pred_fallthru
          _
        // Predicated region
        $region41: #{decoder_deep_forward.1} parent=31 // pred_check
          %p196 = pneg %p84
        $region42: #{decoder_deep_forward.1} parent=31 // pred_check_branch
          %198 = sbr.rel (%p196) target = $region44
        $region43: #{decoder_deep_forward.1} parent=31 // pred_region
          %199 = dma.done [#allocation6], 2048
        $region44: #{decoder_deep_forward.1} parent=31 // pred_fallthru
          _
        %s200 = sand.u32 %s29, 1
        %s201 = scalar_lea.sflag [#allocation3], %s200
        %s202 = sand.u32 %s29, 1
        %s203 = smul.addr %s202, 64
        %s204 = scalar_lea.vmem [#allocation2], %s203
        %p205 = pneg %p42
        %p206 = pneg %p39
        %p207 = pneg %p63
        %p208 = pneg %p60
        %p209 = pneg %p84
        %p210 = pneg %p81
        %p211 = pneg %p110
        %p212 = pneg %p107
        %s213 = sand.u32 %s97, 1
        %s214 = scalar_lea.sflag [#allocation4], %s213
        %s215 = sand.u32 %s97, 1
        %s216 = smul.addr %s215, 64
        %s217 = scalar_lea.vmem [#allocation8], %s216
        %s218 = smul.u32 16, %s21
        %s219 = smul.u32 16, %s21
        %v221 = vld [vmem:[%s187] sm:$0xf]
        %v222 = vld [vmem:[%s187 + $0x4] sm:$0xf]
        %v223 = vld [vmem:[%s187 + $0x8] sm:$0xf]
        %v224 = vld [vmem:[%s187 + $0xc] sm:$0xf]
        %v225 = vld [vmem:[%s187 + $0x10] sm:$0xf]
        %v226 = vld [vmem:[%s187 + $0x14] sm:$0xf]
        %v227 = vld [vmem:[%s187 + $0x18] sm:$0xf]
        %v228 = vld [vmem:[%s187 + $0x1c] sm:$0xf]
        %v229 = vld [vmem:[%s187 + $0x20] sm:$0xf]
        %v230 = vld [vmem:[%s187 + $0x24] sm:$0xf]
        %v231 = vld [vmem:[%s187 + $0x28] sm:$0xf]
        %v232 = vld [vmem:[%s187 + $0x2c] sm:$0xf]
        %v233 = vld [vmem:[%s187 + $0x30] sm:$0xf]
        %v234 = vld [vmem:[%s187 + $0x34] sm:$0xf]
        %v235 = vld [vmem:[%s187 + $0x38] sm:$0xf]
        %v236 = vld [vmem:[%s187 + $0x3c] sm:$0xf]
        %v237 = vld [vmem:[#allocation5] sm:$0xf]
        %v238 = vld [vmem:[#allocation5 + $0x4] sm:$0xf]
        %v239 = vld [vmem:[#allocation5 + $0x8] sm:$0xf]
        %v240 = vld [vmem:[#allocation5 + $0xc] sm:$0xf]
        %v241 = vld [vmem:[#allocation5 + $0x10] sm:$0xf]
        %v242 = vld [vmem:[#allocation5 + $0x14] sm:$0xf]
        %v243 = vld [vmem:[#allocation5 + $0x18] sm:$0xf]
        %v244 = vld [vmem:[#allocation5 + $0x1c] sm:$0xf]
        %v245 = vld [vmem:[#allocation5 + $0x20] sm:$0xf]
        %v246 = vld [vmem:[#allocation5 + $0x24] sm:$0xf]
        %v247 = vld [vmem:[#allocation5 + $0x28] sm:$0xf]
        %v248 = vld [vmem:[#allocation5 + $0x2c] sm:$0xf]
        %v249 = vld [vmem:[#allocation5 + $0x30] sm:$0xf]
        %v250 = vld [vmem:[#allocation5 + $0x34] sm:$0xf]
        %v251 = vld [vmem:[#allocation5 + $0x38] sm:$0xf]
        %v252 = vld [vmem:[#allocation5 + $0x3c] sm:$0xf]
        %v253 = vld [vmem:[#allocation5 + $0x40] sm:$0xf]
        %v254 = vld [vmem:[#allocation5 + $0x44] sm:$0xf]
        %v255 = vld [vmem:[#allocation5 + $0x48] sm:$0xf]
        %v256 = vld [vmem:[#allocation5 + $0x4c] sm:$0xf]
        %v257 = vld [vmem:[#allocation5 + $0x50] sm:$0xf]
        %v258 = vld [vmem:[#allocation5 + $0x54] sm:$0xf]
        %v259 = vld [vmem:[#allocation5 + $0x58] sm:$0xf]
        %v260 = vld [vmem:[#allocation5 + $0x5c] sm:$0xf]
        %v261 = vld [vmem:[#allocation5 + $0x60] sm:$0xf]
        %v262 = vld [vmem:[#allocation5 + $0x64] sm:$0xf]
        %v263 = vld [vmem:[#allocation5 + $0x68] sm:$0xf]
        %v264 = vld [vmem:[#allocation5 + $0x6c] sm:$0xf]
        %v265 = vld [vmem:[#allocation5 + $0x70] sm:$0xf]
        %v266 = vld [vmem:[#allocation5 + $0x74] sm:$0xf]
        %v267 = vld [vmem:[#allocation5 + $0x78] sm:$0xf]
        %v268 = vld [vmem:[#allocation5 + $0x7c] sm:$0xf]
        %v285 = vunpack.c.l.b16 %v221
        %v286 = vunpack.c.l.b16 %v222
        %v287 = vunpack.c.l.b16 %v223
        %v288 = vunpack.c.l.b16 %v224
        %v289 = vunpack.c.l.b16 %v225
        %v290 = vunpack.c.l.b16 %v226
        %v291 = vunpack.c.l.b16 %v227
        %v292 = vunpack.c.l.b16 %v228
        %v293 = vunpack.c.l.b16 %v229
        %v294 = vunpack.c.l.b16 %v230
        %v295 = vunpack.c.l.b16 %v231
        %v296 = vunpack.c.l.b16 %v232
        %v297 = vunpack.c.l.b16 %v233
        %v298 = vunpack.c.l.b16 %v234
        %v299 = vunpack.c.l.b16 %v235
        %v300 = vunpack.c.l.b16 %v236
        %v301 = vpack.c.b16 %v286, %v285
        %v302 = vpack.c.b16 %v288, %v287
        %v303 = vpack.c.b16 %v290, %v289
        %v304 = vpack.c.b16 %v292, %v291
        %v305 = vpack.c.b16 %v294, %v293
        %v306 = vpack.c.b16 %v296, %v295
        %v307 = vpack.c.b16 %v298, %v297
        %v308 = vpack.c.b16 %v300, %v299
        %v349 = vunpack.c.l.b16 %v237
        %v350 = vunpack.c.l.b16 %v238
        %v351 = vunpack.c.l.b16 %v239
        %v352 = vunpack.c.l.b16 %v240
        %v353 = vunpack.c.l.b16 %v241
        %v354 = vunpack.c.l.b16 %v242
        %v355 = vunpack.c.l.b16 %v243
        %v356 = vunpack.c.l.b16 %v244
        %v357 = vunpack.c.l.b16 %v245
        %v358 = vunpack.c.l.b16 %v246
        %v359 = vunpack.c.l.b16 %v247
        %v360 = vunpack.c.l.b16 %v248
        %v361 = vunpack.c.l.b16 %v249
        %v362 = vunpack.c.l.b16 %v250
        %v363 = vunpack.c.l.b16 %v251
        %v364 = vunpack.c.l.b16 %v252
        %v365 = vunpack.c.l.b16 %v253
        %v366 = vunpack.c.l.b16 %v254
        %v367 = vunpack.c.l.b16 %v255
        %v368 = vunpack.c.l.b16 %v256
        %v369 = vunpack.c.l.b16 %v257
        %v370 = vunpack.c.l.b16 %v258
        %v371 = vunpack.c.l.b16 %v259
        %v372 = vunpack.c.l.b16 %v260
        %v373 = vunpack.c.l.b16 %v261
        %v374 = vunpack.c.l.b16 %v262
        %v375 = vunpack.c.l.b16 %v263
        %v376 = vunpack.c.l.b16 %v264
        %v377 = vunpack.c.l.b16 %v265
        %v378 = vunpack.c.l.b16 %v266
        %v379 = vunpack.c.l.b16 %v267
        %v380 = vunpack.c.l.b16 %v268
        %v381 = vpack.c.b16 %v350, %v349
        %v382 = vpack.c.b16 %v352, %v351
        %v383 = vpack.c.b16 %v354, %v353
        %v384 = vpack.c.b16 %v356, %v355
        %v385 = vpack.c.b16 %v358, %v357
        %v386 = vpack.c.b16 %v360, %v359
        %v387 = vpack.c.b16 %v362, %v361
        %v388 = vpack.c.b16 %v364, %v363
        %v389 = vpack.c.b16 %v366, %v365
        %v390 = vpack.c.b16 %v368, %v367
        %v391 = vpack.c.b16 %v370, %v369
        %v392 = vpack.c.b16 %v372, %v371
        %v393 = vpack.c.b16 %v374, %v373
        %v394 = vpack.c.b16 %v376, %v375
        %v395 = vpack.c.b16 %v378, %v377
        %v396 = vpack.c.b16 %v380, %v379
        %413 = vmatprep.subr.bf16.mxu0 0
        %414 = vmatpush1.bf16.xpose.msra.mxu0 %v381
        %415 = vmatprep.subr.bf16.mxu0 0
        %416 = vmatpush1.bf16.xpose.msra.mxu0 %v382
        %417 = vmatprep.subr.bf16.mxu0 0
        %418 = vmatpush1.bf16.xpose.msra.mxu0 %v383
        %419 = vmatprep.subr.bf16.mxu0 0
        %420 = vmatpush1.bf16.xpose.msra.mxu0 %v384
        %421 = vmatprep.subr.bf16.mxu0 0
        %422 = vmatpush1.bf16.xpose.msra.mxu0 %v385
        %423 = vmatprep.subr.bf16.mxu0 0
        %424 = vmatpush1.bf16.xpose.msra.mxu0 %v386
        %425 = vmatprep.subr.bf16.mxu0 0
        %426 = vmatpush1.bf16.xpose.msra.mxu0 %v387
        %427 = vmatprep.subr.bf16.mxu0 0
        %428 = vmatpush1.bf16.xpose.msra.mxu0 %v388
        %429 = vmatprep.subr.bf16.mxu0 0
        %430 = vmatpush1.bf16.xpose.msra.mxu0 %v389
        %431 = vmatprep.subr.bf16.mxu0 0
        %432 = vmatpush1.bf16.xpose.msra.mxu0 %v390
        %433 = vmatprep.subr.bf16.mxu0 0
        %434 = vmatpush1.bf16.xpose.msra.mxu0 %v391
        %435 = vmatprep.subr.bf16.mxu0 0
        %436 = vmatpush1.bf16.xpose.msra.mxu0 %v392
        %437 = vmatprep.subr.bf16.mxu0 0
        %438 = vmatpush1.bf16.xpose.msra.mxu0 %v393
        %439 = vmatprep.subr.bf16.mxu0 0
        %440 = vmatpush1.bf16.xpose.msra.mxu0 %v394
        %441 = vmatprep.subr.bf16.mxu0 0
        %442 = vmatpush1.bf16.xpose.msra.mxu0 %v395
        %443 = vmatprep.subr.bf16.mxu0 0
        %444 = vmatpush1.bf16.xpose.msra.mxu0 %v396
        %445 = vmatprep.mubr.bf16.mxu0 0
        %446 = vmatmul.mubr.bf16.gmra.mrb[0].mxu0 %v301
        %v447 = vpop.f32.mrb[0].mxu0
        %v448 = vadd.f32 0.0, %v447
        %v449 = vpop.f32.mrb[0].mxu0
        %v450 = vadd.f32 0.0, %v449
        %v451 = vpop.f32.mrb[0].mxu0
        %v452 = vadd.f32 0.0, %v451
        %v453 = vpop.f32.mrb[0].mxu0
        %v454 = vadd.f32 0.0, %v453
        %455 = vmatprep.mubr.bf16.mxu0 0
        %456 = vmatmul.mubr.bf16.gmra.mrb[0].mxu0 %v302
        %v457 = vpop.f32.mrb[0].mxu0
        %v458 = vadd.f32 0.0, %v457
        %v459 = vpop.f32.mrb[0].mxu0
        %v460 = vadd.f32 0.0, %v459
        %v461 = vpop.f32.mrb[0].mxu0
        %v462 = vadd.f32 0.0, %v461
        %v463 = vpop.f32.mrb[0].mxu0
        %v464 = vadd.f32 0.0, %v463
        %465 = vmatprep.mubr.bf16.mxu0 0
        %466 = vmatmul.mubr.bf16.gmra.mrb[0].mxu0 %v303
        %v467 = vpop.f32.mrb[0].mxu0
        %v468 = vadd.f32 0.0, %v467
        %v469 = vpop.f32.mrb[0].mxu0
        %v470 = vadd.f32 0.0, %v469
        %v471 = vpop.f32.mrb[0].mxu0
        %v472 = vadd.f32 0.0, %v471
        %v473 = vpop.f32.mrb[0].mxu0
        %v474 = vadd.f32 0.0, %v473
        %475 = vmatprep.mubr.bf16.mxu0 0
        %476 = vmatmul.mubr.bf16.gmra.mrb[0].mxu0 %v304
        %v477 = vpop.f32.mrb[0].mxu0
        %v478 = vadd.f32 0.0, %v477
        %v479 = vpop.f32.mrb[0].mxu0
        %v480 = vadd.f32 0.0, %v479
        %v481 = vpop.f32.mrb[0].mxu0
        %v482 = vadd.f32 0.0, %v481
        %v483 = vpop.f32.mrb[0].mxu0
        %v484 = vadd.f32 0.0, %v483
        %485 = vmatprep.mubr.bf16.mxu0 0
        %486 = vmatmul.mubr.bf16.gmra.mrb[0].mxu0 %v305
        %v487 = vpop.f32.mrb[0].mxu0
        %v488 = vadd.f32 0.0, %v487
        %v489 = vpop.f32.mrb[0].mxu0
        %v490 = vadd.f32 0.0, %v489
        %v491 = vpop.f32.mrb[0].mxu0
        %v492 = vadd.f32 0.0, %v491
        %v493 = vpop.f32.mrb[0].mxu0
        %v494 = vadd.f32 0.0, %v493
        %495 = vmatprep.mubr.bf16.mxu0 0
        %496 = vmatmul.mubr.bf16.gmra.mrb[0].mxu0 %v306
        %v497 = vpop.f32.mrb[0].mxu0
        %v498 = vadd.f32 0.0, %v497
        %v499 = vpop.f32.mrb[0].mxu0
        %v500 = vadd.f32 0.0, %v499
        %v501 = vpop.f32.mrb[0].mxu0
        %v502 = vadd.f32 0.0, %v501
        %v503 = vpop.f32.mrb[0].mxu0
        %v504 = vadd.f32 0.0, %v503
        %505 = vmatprep.mubr.bf16.mxu0 0
        %506 = vmatmul.mubr.bf16.gmra.mrb[0].mxu0 %v307
        %v507 = vpop.f32.mrb[0].mxu0
        %v508 = vadd.f32 0.0, %v507
        %v509 = vpop.f32.mrb[0].mxu0
        %v510 = vadd.f32 0.0, %v509
        %v511 = vpop.f32.mrb[0].mxu0
        %v512 = vadd.f32 0.0, %v511
        %v513 = vpop.f32.mrb[0].mxu0
        %v514 = vadd.f32 0.0, %v513
        %515 = vmatprep.mubr.bf16.mxu0 0
        %516 = vmatmul.mubr.bf16.gmra.mrb[0].mxu0 %v308
        %v517 = vpop.f32.mrb[0].mxu0
        %v518 = vadd.f32 0.0, %v517
        %v519 = vpop.f32.mrb[0].mxu0
        %v520 = vadd.f32 0.0, %v519
        %v521 = vpop.f32.mrb[0].mxu0
        %v522 = vadd.f32 0.0, %v521
        %v523 = vpop.f32.mrb[0].mxu0
        %v524 = vadd.f32 0.0, %v523
        %525 = vdwg.mxu0
        %v526 = vpack.c.bf16 %v452, %v448
        %v527 = vpack.c.bf16 %v454, %v450
        %v528 = vpack.c.bf16 %v462, %v458
        %v529 = vpack.c.bf16 %v464, %v460
        %v530 = vpack.c.bf16 %v472, %v468
        %v531 = vpack.c.bf16 %v474, %v470
        %v532 = vpack.c.bf16 %v482, %v478
        %v533 = vpack.c.bf16 %v484, %v480
        %v534 = vpack.c.bf16 %v492, %v488
        %v535 = vpack.c.bf16 %v494, %v490
        %v536 = vpack.c.bf16 %v502, %v498
        %v537 = vpack.c.bf16 %v504, %v500
        %v538 = vpack.c.bf16 %v512, %v508
        %v539 = vpack.c.bf16 %v514, %v510
        %v540 = vpack.c.bf16 %v522, %v518
        %v541 = vpack.c.bf16 %v524, %v520
        %v542 = vld [vmem:[#allocation7] sm:$0xff]
        %v543 = vld [vmem:[#allocation7 + $0x8] sm:$0xff]
        %v544 = vld [vmem:[#allocation7 + $0x10] sm:$0xff]
        %v545 = vld [vmem:[#allocation7 + $0x18] sm:$0xff]
        %v546 = vld [vmem:[#allocation7 + $0x20] sm:$0xff]
        %v547 = vld [vmem:[#allocation7 + $0x28] sm:$0xff]
        %v548 = vld [vmem:[#allocation7 + $0x30] sm:$0xff]
        %v549 = vld [vmem:[#allocation7 + $0x38] sm:$0xff]
        %v550 = vld [vmem:[#allocation7 + $0x40] sm:$0xff]
        %v551 = vld [vmem:[#allocation7 + $0x48] sm:$0xff]
        %v552 = vld [vmem:[#allocation7 + $0x50] sm:$0xff]
        %v553 = vld [vmem:[#allocation7 + $0x58] sm:$0xff]
        %v554 = vld [vmem:[#allocation7 + $0x60] sm:$0xff]
        %v555 = vld [vmem:[#allocation7 + $0x68] sm:$0xff]
        %v556 = vld [vmem:[#allocation7 + $0x70] sm:$0xff]
        %v557 = vld [vmem:[#allocation7 + $0x78] sm:$0xff]
        %v574 = vunpack.c.l.b16 %v542
        %v575 = vunpack.c.h.b16 %v542
        %v576 = vunpack.c.l.b16 %v543
        %v577 = vunpack.c.h.b16 %v543
        %v578 = vunpack.c.l.b16 %v544
        %v579 = vunpack.c.h.b16 %v544
        %v580 = vunpack.c.l.b16 %v545
        %v581 = vunpack.c.h.b16 %v545
        %v582 = vunpack.c.l.b16 %v546
        %v583 = vunpack.c.h.b16 %v546
        %v584 = vunpack.c.l.b16 %v547
        %v585 = vunpack.c.h.b16 %v547
        %v586 = vunpack.c.l.b16 %v548
        %v587 = vunpack.c.h.b16 %v548
        %v588 = vunpack.c.l.b16 %v549
        %v589 = vunpack.c.h.b16 %v549
        %v590 = vunpack.c.l.b16 %v550
        %v591 = vunpack.c.h.b16 %v550
        %v592 = vunpack.c.l.b16 %v551
        %v593 = vunpack.c.h.b16 %v551
        %v594 = vunpack.c.l.b16 %v552
        %v595 = vunpack.c.h.b16 %v552
        %v596 = vunpack.c.l.b16 %v553
        %v597 = vunpack.c.h.b16 %v553
        %v598 = vunpack.c.l.b16 %v554
        %v599 = vunpack.c.h.b16 %v554
        %v600 = vunpack.c.l.b16 %v555
        %v601 = vunpack.c.h.b16 %v555
        %v602 = vunpack.c.l.b16 %v556
        %v603 = vunpack.c.h.b16 %v556
        %v604 = vunpack.c.l.b16 %v557
        %v605 = vunpack.c.h.b16 %v557
        %v606 = vpack.c.b16 %v576, %v574
        %v607 = vpack.c.b16 %v577, %v575
        %v608 = vpack.c.b16 %v580, %v578
        %v609 = vpack.c.b16 %v581, %v579
        %v610 = vpack.c.b16 %v584, %v582
        %v611 = vpack.c.b16 %v585, %v583
        %v612 = vpack.c.b16 %v588, %v586
        %v613 = vpack.c.b16 %v589, %v587
        %v614 = vpack.c.b16 %v592, %v590
        %v615 = vpack.c.b16 %v593, %v591
        %v616 = vpack.c.b16 %v596, %v594
        %v617 = vpack.c.b16 %v597, %v595
        %v618 = vpack.c.b16 %v600, %v598
        %v619 = vpack.c.b16 %v601, %v599
        %v620 = vpack.c.b16 %v604, %v602
        %v621 = vpack.c.b16 %v605, %v603
        %638 = vmatprep.subr.bf16.mxu0 %v607
        %639 = vmatpush1.bf16.xpose.msra.mxu0 %v606
        %640 = vmatprep.subr.bf16.mxu0 %v609
        %641 = vmatpush1.bf16.xpose.msra.mxu0 %v608
        %642 = vmatprep.subr.bf16.mxu0 %v611
        %643 = vmatpush1.bf16.xpose.msra.mxu0 %v610
        %644 = vmatprep.subr.bf16.mxu0 %v613
        %645 = vmatpush1.bf16.xpose.msra.mxu0 %v612
        %646 = vmatprep.subr.bf16.mxu0 %v615
        %647 = vmatpush1.bf16.xpose.msra.mxu0 %v614
        %648 = vmatprep.subr.bf16.mxu0 %v617
        %649 = vmatpush1.bf16.xpose.msra.mxu0 %v616
        %650 = vmatprep.subr.bf16.mxu0 %v619
        %651 = vmatpush1.bf16.xpose.msra.mxu0 %v618
        %652 = vmatprep.subr.bf16.mxu0 %v621
        %653 = vmatpush1.bf16.xpose.msra.mxu0 %v620
        %654 = vmatprep.subr.bf16.mxu0 0
        %655 = vmatpush1.bf16.xpose.msra.mxu0 0
        %656 = vmatprep.subr.bf16.mxu0 0
        %657 = vmatpush1.bf16.xpose.msra.mxu0 0
        %658 = vmatprep.subr.bf16.mxu0 0
        %659 = vmatpush1.bf16.xpose.msra.mxu0 0
        %660 = vmatprep.subr.bf16.mxu0 0
        %661 = vmatpush1.bf16.xpose.msra.mxu0 0
        %662 = vmatprep.subr.bf16.mxu0 0
        %663 = vmatpush1.bf16.xpose.msra.mxu0 0
        %664 = vmatprep.subr.bf16.mxu0 0
        %665 = vmatpush1.bf16.xpose.msra.mxu0 0
        %666 = vmatprep.subr.bf16.mxu0 0
        %667 = vmatpush1.bf16.xpose.msra.mxu0 0
        %668 = vmatprep.subr.bf16.mxu0 0
        %669 = vmatpush1.bf16.xpose.msra.mxu0 0
        %670 = vmatprep.mubr.bf16.mxu0 %v527
        %671 = vmatmul.mubr.bf16.gmra.mrb[0].mxu0 %v526
        %v672 = vpop.f32.mrb[0].mxu0
        %v673 = vadd.f32 0.0, %v672
        %v674 = vpop.f32.mrb[0].mxu0
        %v675 = vpop.f32.mrb[0].mxu0
        %v676 = vadd.f32 0.0, %v675
        %v677 = vpop.f32.mrb[0].mxu0
        %678 = vmatprep.mubr.bf16.mxu0 %v529
        %679 = vmatmul.mubr.bf16.gmra.mrb[0].mxu0 %v528
        %v680 = vpop.f32.mrb[0].mxu0
        %v681 = vadd.f32 0.0, %v680
        %v682 = vpop.f32.mrb[0].mxu0
        %v683 = vpop.f32.mrb[0].mxu0
        %v684 = vadd.f32 0.0, %v683
        %v685 = vpop.f32.mrb[0].mxu0
        %686 = vmatprep.mubr.bf16.mxu0 %v531
        %687 = vmatmul.mubr.bf16.gmra.mrb[0].mxu0 %v530
        %v688 = vpop.f32.mrb[0].mxu0
        %v689 = vadd.f32 0.0, %v688
        %v690 = vpop.f32.mrb[0].mxu0
        %v691 = vpop.f32.mrb[0].mxu0
        %v692 = vadd.f32 0.0, %v691
        %v693 = vpop.f32.mrb[0].mxu0
        %694 = vmatprep.mubr.bf16.mxu0 %v533
        %695 = vmatmul.mubr.bf16.gmra.mrb[0].mxu0 %v532
        %v696 = vpop.f32.mrb[0].mxu0
        %v697 = vadd.f32 0.0, %v696
        %v698 = vpop.f32.mrb[0].mxu0
        %v699 = vpop.f32.mrb[0].mxu0
        %v700 = vadd.f32 0.0, %v699
        %v701 = vpop.f32.mrb[0].mxu0
        %702 = vmatprep.mubr.bf16.mxu0 %v535
        %703 = vmatmul.mubr.bf16.gmra.mrb[0].mxu0 %v534
        %v704 = vpop.f32.mrb[0].mxu0
        %v705 = vadd.f32 0.0, %v704
        %v706 = vpop.f32.mrb[0].mxu0
        %v707 = vpop.f32.mrb[0].mxu0
        %v708 = vadd.f32 0.0, %v707
        %v709 = vpop.f32.mrb[0].mxu0
        %710 = vmatprep.mubr.bf16.mxu0 %v537
        %711 = vmatmul.mubr.bf16.gmra.mrb[0].mxu0 %v536
        %v712 = vpop.f32.mrb[0].mxu0
        %v713 = vadd.f32 0.0, %v712
        %v714 = vpop.f32.mrb[0].mxu0
        %v715 = vpop.f32.mrb[0].mxu0
        %v716 = vadd.f32 0.0, %v715
        %v717 = vpop.f32.mrb[0].mxu0
        %718 = vmatprep.mubr.bf16.mxu0 %v539
        %719 = vmatmul.mubr.bf16.gmra.mrb[0].mxu0 %v538
        %v720 = vpop.f32.mrb[0].mxu0
        %v721 = vadd.f32 0.0, %v720
        %v722 = vpop.f32.mrb[0].mxu0
        %v723 = vpop.f32.mrb[0].mxu0
        %v724 = vadd.f32 0.0, %v723
        %v725 = vpop.f32.mrb[0].mxu0
        %726 = vmatprep.mubr.bf16.mxu0 %v541
        %727 = vmatmul.mubr.bf16.gmra.mrb[0].mxu0 %v540
        %v728 = vpop.f32.mrb[0].mxu0
        %v729 = vadd.f32 0.0, %v728
        %v730 = vpop.f32.mrb[0].mxu0
        %v731 = vpop.f32.mrb[0].mxu0
        %v732 = vadd.f32 0.0, %v731
        %v733 = vpop.f32.mrb[0].mxu0
        %734 = vdwg.mxu0
        %v735 = vpack.c.bf16 %v676, %v673
        %v736 = vpack.c.bf16 %v684, %v681
        %v737 = vpack.c.bf16 %v692, %v689
        %v738 = vpack.c.bf16 %v700, %v697
        %v739 = vpack.c.bf16 %v708, %v705
        %v740 = vpack.c.bf16 %v716, %v713
        %v741 = vpack.c.bf16 %v724, %v721
        %v742 = vpack.c.bf16 %v732, %v729
        %v751 = vunpack.c.l.b16 %v735
        %v752 = vunpack.c.h.b16 %v735
        %v753 = vunpack.c.l.b16 %v736
        %v754 = vunpack.c.h.b16 %v736
        %v755 = vunpack.c.l.b16 %v737
        %v756 = vunpack.c.h.b16 %v737
        %v757 = vunpack.c.l.b16 %v738
        %v758 = vunpack.c.h.b16 %v738
        %v759 = vunpack.c.l.b16 %v739
        %v760 = vunpack.c.h.b16 %v739
        %v761 = vunpack.c.l.b16 %v740
        %v762 = vunpack.c.h.b16 %v740
        %v763 = vunpack.c.l.b16 %v741
        %v764 = vunpack.c.h.b16 %v741
        %v765 = vunpack.c.l.b16 %v742
        %v766 = vunpack.c.h.b16 %v742
        %v767 = vpack.c.b16 %v751, %v751
        %v768 = vpack.c.b16 %v752, %v752
        %v769 = vpack.c.b16 %v753, %v753
        %v770 = vpack.c.b16 %v754, %v754
        %v771 = vpack.c.b16 %v755, %v755
        %v772 = vpack.c.b16 %v756, %v756
        %v773 = vpack.c.b16 %v757, %v757
        %v774 = vpack.c.b16 %v758, %v758
        %v775 = vpack.c.b16 %v759, %v759
        %v776 = vpack.c.b16 %v760, %v760
        %v777 = vpack.c.b16 %v761, %v761
        %v778 = vpack.c.b16 %v762, %v762
        %v779 = vpack.c.b16 %v763, %v763
        %v780 = vpack.c.b16 %v764, %v764
        %v781 = vpack.c.b16 %v765, %v765
        %v782 = vpack.c.b16 %v766, %v766
        %799 = vst [vmem:[%s217] sm:$0xf] %v767
        %800 = vst [vmem:[%s217 + $0x4] sm:$0xf] %v768
        %801 = vst [vmem:[%s217 + $0x8] sm:$0xf] %v769
        %802 = vst [vmem:[%s217 + $0xc] sm:$0xf] %v770
        %803 = vst [vmem:[%s217 + $0x10] sm:$0xf] %v771
        %804 = vst [vmem:[%s217 + $0x14] sm:$0xf] %v772
        %805 = vst [vmem:[%s217 + $0x18] sm:$0xf] %v773
        %806 = vst [vmem:[%s217 + $0x1c] sm:$0xf] %v774
        %807 = vst [vmem:[%s217 + $0x20] sm:$0xf] %v775
        %808 = vst [vmem:[%s217 + $0x24] sm:$0xf] %v776
        %809 = vst [vmem:[%s217 + $0x28] sm:$0xf] %v777
        %810 = vst [vmem:[%s217 + $0x2c] sm:$0xf] %v778
        %811 = vst [vmem:[%s217 + $0x30] sm:$0xf] %v779
        %812 = vst [vmem:[%s217 + $0x34] sm:$0xf] %v780
        %813 = vst [vmem:[%s217 + $0x38] sm:$0xf] %v781
        %814 = vst [vmem:[%s217 + $0x3c] sm:$0xf] %v782
        %s815 = sand.u32 %s97, 1
        %s816 = scalar_lea.sflag [#allocation4], %s815
        %s817 = sand.u32 %s97, 1
        %s818 = smul.addr %s817, 64
        %s819 = scalar_lea.vmem [#allocation8], %s818
        // Predicated region
        $region45: #{decoder_deep_forward.1} parent=31 // pred_check
          %p820 = pneg %p107
        $region46: #{decoder_deep_forward.1} parent=31 // pred_check_branch
          %822 = sbr.rel (%p820) target = $region48
        $region47: #{decoder_deep_forward.1} parent=31 // pred_region
          %s823 = smul.u32 16, %s21
          %s825 = ssub.s32 1024, 1024
          %826 = vsyncadd %s816, %s825
          %s827 = smul.addr %s823, 64
          %s828 = scalar_lea.hbm %s3, %s827
          %s829 = sshll.u32 %s819, 4
          %s830 = int_to_ptr.vmem [resolvable:$true] %s829
          %835 = dma.vmem_to_hbm [thread:$0]  %s830, 1024, %s828, %s816, 64, 64, 4
        $region48: #{decoder_deep_forward.1} parent=31 // pred_fallthru
          _
      $region32: #{decoder_deep_forward.1} parent=5 // pred_fallthru
        _
      %p836 = scmp.le.s32.totalorder 2, %s16
      // Predicated region
      $region49: #{decoder_deep_forward.1} parent=5 // pred_check
        %p837 = pneg %p836
      $region50: #{decoder_deep_forward.1} parent=5 // pred_check_branch
        %839 = sbr.rel (%p837) target = $region52
      $region51: #{decoder_deep_forward.1} parent=5 // pred_region
        %s840 = ssub.s32 %s16, 2
        // Predicated region
        $region53: #{decoder_deep_forward.1} parent=51 // pred_check
          %p841 = pneg %p113
        $region54: #{decoder_deep_forward.1} parent=51 // pred_check_branch
          %843 = sbr.rel (%p841) target = $region56
        $region55: #{decoder_deep_forward.1} parent=51 // pred_region
          %s844 = sand.u32 %s98, 1
          %s845 = scalar_lea.sflag [#allocation4], %s844
          %s846 = sand.u32 %s98, 1
          %s847 = smul.addr %s846, 64
          %s848 = scalar_lea.vmem [#allocation8], %s847
          %849 = dma.done %s845, 1024
        $region56: #{decoder_deep_forward.1} parent=51 // pred_fallthru
          _
      $region52: #{decoder_deep_forward.1} parent=5 // pred_fallthru
        _
    $region6: #{decoder_deep_forward.1} parent=1 // loop_footer
      %s20 = sadd.s32 1, %s16
    $region7: #{decoder_deep_forward.1} parent=1 // loop_footer_branch
      %15 = sbr.rel target = $region3
    $region8: #{decoder_deep_forward.1} parent=1 // loop_exit
      _
    %850 = vsyncpa [#allocation3], 1
    %s851 = scalar_lea.sflag [#allocation3], 1
    %852 = vsyncpa %s851, 1
    %853 = vsyncpa [#allocation6], 1
    %854 = vsyncpa [#allocation4], 1
    %s855 = scalar_lea.sflag [#allocation4], 1
    %856 = vsyncpa %s855, 1

</llo_original>
